<compile_context>
chip_gen: v6e
topology: v6e:2x2x1
jax: 0.10.0
libtpu: 0.0.40
codegen_flags: <defaults>
</compile_context>

<pallas_src>
import jax
import jax.numpy as jnp
from jax.experimental import pallas as pl
from jax.experimental.pallas import tpu as pltpu


def _pos_embed_kernel(w_ref, o_ref):
    # w_ref: (seq_tile, d_model) tile of W_pos
    # o_ref: (b_tile, seq_tile, d_model) output slab for this (seq, batch) step
    o_ref[...] = jnp.broadcast_to(
        w_ref[...][None, :, :].astype(o_ref.dtype), o_ref.shape
    )


def _tpu_generation_info():
    """Returns (vmem_block_budget_bytes, vmem_limit_bytes, num_tensorcores)."""
    kind = ""
    try:
        kind = jax.devices()[0].device_kind.lower()
    except Exception:
        pass
    num_tc = 2 if "v7" in kind else 1

    vmem_cap = None
    try:
        vmem_cap = getattr(pltpu.get_tpu_info(), "vmem_capacity_bytes", None)
    except Exception:
        vmem_cap = None
    if vmem_cap is None:
        vmem_cap = (64 if num_tc == 2 else 128) * 1024 * 1024

    if vmem_cap <= 64 * 1024 * 1024:
        # v7x: 64 MiB VMEM per TensorCore — conservative slabs.
        return 40 * 1024 * 1024, 48 * 1024 * 1024, num_tc
    # v5e / v6e: 128 MiB VMEM — bigger slabs, fewer grid steps.
    return 88 * 1024 * 1024, 100 * 1024 * 1024, num_tc


def _choose_tiles(batch, seq_len, d_model, itemsize, budget, num_tc):
    """Pick (b_tile, seq_tile, grid_b, grid_s) within the VMEM budget."""
    row_unit = d_model * itemsize  # bytes per sequence row

    # Seq tile: full seq if one row block stays <= budget/8; otherwise a
    # multiple of 8, at most 2048 rows (keeps writeback DMAs multi-MB while
    # capping VMEM independently of seq_len).
    max_rows_by_budget = max(8, int((budget // 8) // row_unit) // 8 * 8)
    if seq_len * row_unit <= budget // 8:
        seq_tile = seq_len
    else:
        seq_tile = min(2048, max_rows_by_budget)
    grid_s = pl.cdiv(seq_len, seq_tile)

    # Batch tile: fill the remaining budget with a double-buffered output slab.
    # Reserve 2x the W tile (conservative — covers the double-buffered fallback).
    w_bytes = 2 * seq_tile * row_unit
    row_bytes = seq_tile * row_unit
    avail = max(budget - w_bytes, 2 * row_bytes)
    b_tile = max(1, int(avail // (2 * row_bytes)))
    b_tile = min(b_tile, batch)

    if num_tc == 2:
        # v7x megacore: ensure >=2 parallel steps, prefer an even total count.
        if grid_s == 1 and batch > 1:
            b_tile = min(b_tile, -(-batch // 2))  # ceil(batch/2) -> >=2 steps
        total = grid_s * pl.cdiv(batch, b_tile)
        if total > 1 and total % 2 == 1:
            for cand in range(b_tile, 0, -1):
                if (grid_s * pl.cdiv(batch, cand)) % 2 == 0:
                    b_tile = cand
                    break

    grid_b = pl.cdiv(batch, b_tile)
    return b_tile, seq_tile, grid_b, grid_s


def pos_embed(tokens: jax.Array, w_pos: jax.Array, out_dtype=None) -> jax.Array:
    """tokens: int array [batch, seq] (only the shape matters);
    w_pos: float array [n_ctx, d_model]. Returns [batch, seq, d_model]."""
    batch, seq_len = tokens.shape
    n_ctx, d_model = w_pos.shape
    assert seq_len <= n_ctx

    if out_dtype is None:
        out_dtype = w_pos.dtype
    if jnp.dtype(out_dtype) != jnp.dtype(w_pos.dtype):
        # Cast the small parameter once in the wrapper (cheapest place).
        w_pos = w_pos.astype(out_dtype)

    itemsize = jnp.dtype(w_pos.dtype).itemsize
    budget, vmem_limit, num_tc = _tpu_generation_info()
    b_tile, seq_tile, grid_b, grid_s = _choose_tiles(
        batch, seq_len, d_model, itemsize, budget, num_tc
    )

    # Satisfy the (8,128) block rule for the W tile: either the tile is a
    # multiple of 8 rows, or it must equal the full first dim of the array.
    if grid_s == 1 and seq_len % 8 != 0 and seq_len != n_ctx:
        w_arg = w_pos[:seq_len]
    else:
        w_arg = w_pos

    w_block = (seq_tile, d_model)
    w_index = lambda s, b: (s, 0)
    out_spec = pl.BlockSpec((b_tile, seq_tile, d_model), lambda s, b: (b, s, 0))

    def build(single_buffer_w: bool):
        if single_buffer_w:
            w_spec = pl.BlockSpec(w_block, w_index, pipeline_mode=pl.Buffered(1))
        else:
            w_spec = pl.BlockSpec(w_block, w_index)
        return pl.pallas_call(
            _pos_embed_kernel,
            out_shape=jax.ShapeDtypeStruct((batch, seq_len, d_model), out_dtype),
            grid_spec=pltpu.PrefetchScalarGridSpec(
                num_scalar_prefetch=0,
                grid=(grid_s, grid_b),
                in_specs=[w_spec],
                out_specs=out_spec,
            ),
            compiler_params=pltpu.CompilerParams(
                dimension_semantics=("parallel", "parallel"),
                vmem_limit_bytes=vmem_limit,
            ),
        )

    # W's block index is constant across the whole grid only when grid_s == 1;
    # in that case a second buffer is pure waste, so request single buffering,
    # falling back to the default pipeline if this jax version rejects it.
    if grid_s == 1 and hasattr(pl, "Buffered"):
        try:
            return build(True)(w_arg)
        except Exception:
            pass
    return build(False)(w_arg)


if __name__ == "__main__":
    # Small config consistent with the module: n_ctx=16, d_model=128.
    n_ctx, d_model = 16, 128
    batch, seq_len = 2, 8
    init_range = 0.02

    key = jax.random.PRNGKey(0)
    k_w, k_tok = jax.random.split(key)

    # Deterministic parameter init: normal(std=init_range), like nn.init.normal_.
    W_pos = init_range * jax.random.normal(k_w, (n_ctx, d_model), dtype=jnp.float32)

    # tokens: Int[batch, position] — values are irrelevant, only shape matters.
    tokens = jax.random.randint(k_tok, (batch, seq_len), 0, 50257, dtype=jnp.int32)

    out = pos_embed(tokens, W_pos)
    out = jax.block_until_ready(out)

    # Reference check: broadcast of W_pos[:seq_len] over batch.
    ref = jnp.broadcast_to(W_pos[:seq_len][None], (batch, seq_len, d_model))
    assert out.shape == (batch, seq_len, d_model)
    assert out.dtype == W_pos.dtype
    assert jnp.allclose(out, ref)

    print("KERNEL_OK")
</pallas_src>

<mosaic_0001>
module attributes {stable_mosaic.version = 11 : i64} {
  func.func @_pos_embed_kernel(%arg0: i32, %arg1: i32, %arg2: memref<8x128xf32, #tpu.memory_space<vmem>>, %arg3: memref<2x8x128xf32, #tpu.memory_space<vmem>>) attributes {dimension_semantics = [#tpu.dimension_semantics<parallel>, #tpu.dimension_semantics<parallel>], iteration_bounds = array<i64: 1, 1>, scalar_prefetch = 0 : i64, scratch_operands = 0 : i64, tpu.core_type = #tpu.core_type<tc>, window_params = [{pipeline_mode = #tpu.pipeline_mode<synchronous>, transform_indices = @transform_0, window_bounds = array<i64: 8, 128>}, {transform_indices = @transform_1, window_bounds = array<i64: 2, 8, 128>}]} {
    %c0 = arith.constant 0 : index
    %c0_0 = arith.constant 0 : index
    %0 = vector.load %arg2[%c0, %c0_0] : memref<8x128xf32, #tpu.memory_space<vmem>>, vector<8x128xf32>
    %1 = vector.shape_cast %0 : vector<8x128xf32> to vector<1x8x128xf32>
    %2 = vector.shape_cast %1 : vector<1x8x128xf32> to vector<1x8x128xf32>
    %3 = vector.broadcast %2 : vector<1x8x128xf32> to vector<2x8x128xf32>
    %c0_1 = arith.constant 0 : index
    %c0_2 = arith.constant 0 : index
    %c0_3 = arith.constant 0 : index
    %4 = vector.load %arg3[%c0_1, %c0_2, %c0_3] : memref<2x8x128xf32, #tpu.memory_space<vmem>>, vector<2x8x128xf32>
    tpu.vector_store %arg3[%c0_1, %c0_2, %c0_3], %3 {strides = array<i32>} : memref<2x8x128xf32, #tpu.memory_space<vmem>>, vector<2x8x128xf32>,
    return
  }
  func.func @transform_0(%arg0: i32, %arg1: i32) -> (i32, i32) {
    %c0_i32 = arith.constant 0 : i32
    %c0_i32_0 = arith.constant 0 : i32
    return %arg0, %c0_i32 : i32, i32
  }
  func.func @transform_1(%arg0: i32, %arg1: i32) -> (i32, i32, i32) {
    %c0_i32 = arith.constant 0 : i32
    %c0_i32_0 = arith.constant 0 : i32
    return %arg1, %arg0, %c0_i32 : i32, i32, i32
  }
}

module attributes {stable_mosaic.version = 11 : i64} {
  func.func @_pos_embed_kernel(%arg0: i32, %arg1: i32, %arg2: memref<8x128xf32, #tpu.memory_space<vmem>>, %arg3: memref<2x8x128xf32, #tpu.memory_space<vmem>>) attributes {dimension_semantics = [#tpu.dimension_semantics<parallel>, #tpu.dimension_semantics<parallel>], iteration_bounds = array<i64: 1, 1>, scalar_prefetch = 0 : i64, scratch_operands = 0 : i64, tpu.core_type = #tpu.core_type<tc>, window_params = [{transform_indices = @transform_0, window_bounds = array<i64: 8, 128>}, {transform_indices = @transform_1, window_bounds = array<i64: 2, 8, 128>}]} {
    %c0 = arith.constant 0 : index
    %c0_0 = arith.constant 0 : index
    %0 = vector.load %arg2[%c0, %c0_0] : memref<8x128xf32, #tpu.memory_space<vmem>>, vector<8x128xf32>
    %1 = vector.shape_cast %0 : vector<8x128xf32> to vector<1x8x128xf32>
    %2 = vector.shape_cast %1 : vector<1x8x128xf32> to vector<1x8x128xf32>
    %3 = vector.broadcast %2 : vector<1x8x128xf32> to vector<2x8x128xf32>
    %c0_1 = arith.constant 0 : index
    %c0_2 = arith.constant 0 : index
    %c0_3 = arith.constant 0 : index
    %4 = vector.load %arg3[%c0_1, %c0_2, %c0_3] : memref<2x8x128xf32, #tpu.memory_space<vmem>>, vector<2x8x128xf32>
    tpu.vector_store %arg3[%c0_1, %c0_2, %c0_3], %3 {strides = array<i32>} : memref<2x8x128xf32, #tpu.memory_space<vmem>>, vector<2x8x128xf32>,
    return
  }
  func.func @transform_0(%arg0: i32, %arg1: i32) -> (i32, i32) {
    %c0_i32 = arith.constant 0 : i32
    %c0_i32_0 = arith.constant 0 : i32
    return %arg0, %c0_i32 : i32, i32
  }
  func.func @transform_1(%arg0: i32, %arg1: i32) -> (i32, i32, i32) {
    %c0_i32 = arith.constant 0 : i32
    %c0_i32_0 = arith.constant 0 : i32
    return %arg1, %arg0, %c0_i32 : i32, i32, i32
  }
}

</mosaic_0001>

<llo_original>
// kernel: tpu_custom_call.1
$region0: #{tpu_custom_call.1}
  #allocation0 [shape = 'u32[]', space=smem, size = 0x4, offset = 0x4, fixed_abs, tag = 'smem constant byte address 0x4 - core index']
  #allocation1 [shape = 'u32[144,128]{1,0:T(1,128)}', space=vmem, size = 0x12000, scoped, tag = 'internal scratch']
  %s0 = inlined_call_operand.hbm [shape: f32[16,128], index: 0, kind: input, shape index: {}]
  %s1 = inlined_call_operand.hbm [shape: f32[2,8,128], index: 1, kind: output, shape index: {}]
  %s2 = sld [smem:[#allocation0]]
  $region18: #{tpu_custom_call.1} parent=0
    _
  %s4 = ssub.s32 1, %s2
  %s5 = scalar_select 0, %s4, %s2
  $region1: #{tpu_custom_call.1} parent=0
    #allocation2 [shape = 'u8[4096]{0}', space=vmem, size = 0x1000, scoped, tag = 'input window, operand 0, single buffered']
    #allocation3 [shape = 's32[1]{0}', space=sflag, size = 0x4, scoped, tag = 'scoped memory for tpu_custom_call.1']
    #allocation4 [shape = 's32[1]{0}', space=sflag, size = 0x4, scoped, tag = 'scoped memory for tpu_custom_call.1']
    #allocation5 [shape = 'u8[8192]{0}', space=vmem, size = 0x2000, scoped, tag = 'output window, operand 0, single buffered']
    %6 = vsyncpa [#allocation3], 0
    %7 = vsyncpa [#allocation4], 0
    // Predicated region
    $region2: #{tpu_custom_call.1} parent=1 // pred_check
      _
    $region3: #{tpu_custom_call.1} parent=1 // pred_check_branch
      %9 = sbr.rel (0) target = $region5
    $region4: #{tpu_custom_call.1} parent=1 // pred_region
      %s11 = ssub.s32 128, 128
      %12 = vsyncadd [#allocation3], %s11
      %s14 = sshll.u32 [#allocation2], 4
      %s15 = int_to_ptr.vmem [resolvable:$true] %s14
      %17 = dma.hbm_to_vmem [thread:$0]  %s0, 128, %s15, [#allocation3]
    $region5: #{tpu_custom_call.1} parent=1 // pred_fallthru
      _
    // Predicated region
    $region6: #{tpu_custom_call.1} parent=1 // pred_check
      _
    $region7: #{tpu_custom_call.1} parent=1 // pred_check_branch
      %19 = sbr.rel (0) target = $region9
    $region8: #{tpu_custom_call.1} parent=1 // pred_region
      %20 = dma.done [#allocation3], 128
    $region9: #{tpu_custom_call.1} parent=1 // pred_fallthru
      _
    %v21 = vld [vmem:[#allocation2] sm:$0xff]
    %22 = vst [vmem:[#allocation5] sm:$0xff] %v21
    %23 = vst [vmem:[#allocation5 + $0x8] sm:$0xff] %v21
    // Predicated region
    $region10: #{tpu_custom_call.1} parent=1 // pred_check
      _
    $region11: #{tpu_custom_call.1} parent=1 // pred_check_branch
      %25 = sbr.rel (0) target = $region13
    $region12: #{tpu_custom_call.1} parent=1 // pred_region
      %s27 = ssub.s32 256, 256
      %28 = vsyncadd [#allocation4], %s27
      %s29 = sshll.u32 [#allocation5], 4
      %s30 = int_to_ptr.vmem [resolvable:$true] %s29
      %35 = dma.vmem_to_hbm [thread:$0]  %s30, 256, %s1, [#allocation4], 128, 128, 8
    $region13: #{tpu_custom_call.1} parent=1 // pred_fallthru
      _
    // Predicated region
    $region14: #{tpu_custom_call.1} parent=1 // pred_check
      _
    $region15: #{tpu_custom_call.1} parent=1 // pred_check_branch
      %37 = sbr.rel (0) target = $region17
    $region16: #{tpu_custom_call.1} parent=1 // pred_region
      %38 = dma.done [#allocation4], 256
    $region17: #{tpu_custom_call.1} parent=1 // pred_fallthru
      _
    %39 = vsyncpa [#allocation3], 1
    %40 = vsyncpa [#allocation4], 1

// kernel: tpu_custom_call.1
$region0: #{tpu_custom_call.1}
  #allocation0 [shape = 'u32[]', space=smem, size = 0x4, offset = 0x4, fixed_abs, tag = 'smem constant byte address 0x4 - core index']
  #allocation1 [shape = 'u32[144,128]{1,0:T(1,128)}', space=vmem, size = 0x12000, scoped, tag = 'internal scratch']
  %s0 = inlined_call_operand.hbm [shape: f32[16,128], index: 0, kind: input, shape index: {}]
  %s1 = inlined_call_operand.hbm [shape: f32[2,8,128], index: 1, kind: output, shape index: {}]
  %s2 = sld [smem:[#allocation0]]
  $region18: #{tpu_custom_call.1} parent=0
    _
  %s4 = ssub.s32 1, %s2
  %s5 = scalar_select 0, %s4, %s2
  $region1: #{tpu_custom_call.1} parent=0
    #allocation2 [shape = 'u8[4096]{0}', space=vmem, size = 0x1000, scoped, tag = 'input window, operand 0, single buffered']
    #allocation3 [shape = 's32[1]{0}', space=sflag, size = 0x4, scoped, tag = 'scoped memory for tpu_custom_call.1']
    #allocation4 [shape = 's32[1]{0}', space=sflag, size = 0x4, scoped, tag = 'scoped memory for tpu_custom_call.1']
    #allocation5 [shape = 'u8[8192]{0}', space=vmem, size = 0x2000, scoped, tag = 'output window, operand 0, single buffered']
    %6 = vsyncpa [#allocation3], 0
    %7 = vsyncpa [#allocation4], 0
    // Predicated region
    $region2: #{tpu_custom_call.1} parent=1 // pred_check
      _
    $region3: #{tpu_custom_call.1} parent=1 // pred_check_branch
      %9 = sbr.rel (0) target = $region5
    $region4: #{tpu_custom_call.1} parent=1 // pred_region
      %s11 = ssub.s32 128, 128
      %12 = vsyncadd [#allocation3], %s11
      %s14 = sshll.u32 [#allocation2], 4
      %s15 = int_to_ptr.vmem [resolvable:$true] %s14
      %17 = dma.hbm_to_vmem [thread:$0]  %s0, 128, %s15, [#allocation3]
    $region5: #{tpu_custom_call.1} parent=1 // pred_fallthru
      _
    // Predicated region
    $region6: #{tpu_custom_call.1} parent=1 // pred_check
      _
    $region7: #{tpu_custom_call.1} parent=1 // pred_check_branch
      %19 = sbr.rel (0) target = $region9
    $region8: #{tpu_custom_call.1} parent=1 // pred_region
      %20 = dma.done [#allocation3], 128
    $region9: #{tpu_custom_call.1} parent=1 // pred_fallthru
      _
    %v21 = vld [vmem:[#allocation2] sm:$0xff]
    %22 = vst [vmem:[#allocation5] sm:$0xff] %v21
    %23 = vst [vmem:[#allocation5 + $0x8] sm:$0xff] %v21
    // Predicated region
    $region10: #{tpu_custom_call.1} parent=1 // pred_check
      _
    $region11: #{tpu_custom_call.1} parent=1 // pred_check_branch
      %25 = sbr.rel (0) target = $region13
    $region12: #{tpu_custom_call.1} parent=1 // pred_region
      %s27 = ssub.s32 256, 256
      %28 = vsyncadd [#allocation4], %s27
      %s29 = sshll.u32 [#allocation5], 4
      %s30 = int_to_ptr.vmem [resolvable:$true] %s29
      %35 = dma.vmem_to_hbm [thread:$0]  %s30, 256, %s1, [#allocation4], 128, 128, 8
    $region13: #{tpu_custom_call.1} parent=1 // pred_fallthru
      _
    // Predicated region
    $region14: #{tpu_custom_call.1} parent=1 // pred_check
      _
    $region15: #{tpu_custom_call.1} parent=1 // pred_check_branch
      %37 = sbr.rel (0) target = $region17
    $region16: #{tpu_custom_call.1} parent=1 // pred_region
      %38 = dma.done [#allocation4], 256
    $region17: #{tpu_custom_call.1} parent=1 // pred_fallthru
      _
    %39 = vsyncpa [#allocation3], 1
    %40 = vsyncpa [#allocation4], 1

</llo_original>
